<compile_context>
chip_gen: v5e
topology: v5e:2x2
jax: 0.10.0
libtpu: 0.0.40
codegen_flags: <defaults>
</compile_context>

<pallas_src>
import jax
import jax.numpy as jnp
from jax.experimental import pallas as pl
from jax.experimental.pallas import tpu as pltpu


def encoder_kernel(e_ref, si_ref, sj_ref, we_ref, wsi_ref, wsj_ref, b_ref,
                   o_ref):
    # e_ref:  (TILE_N, e_dim)        VMEM
    # si_ref: (TILE_N, s_dim)        VMEM
    # sj_ref: (TILE_N, s_dim)        VMEM
    # we_ref: (e_dim, out)           VMEM (resident across all tiles)
    # wsi_ref/(wsj_ref): (s_dim,out) VMEM (resident)
    # b_ref:  (1, out)               VMEM (resident)
    # o_ref:  (TILE_N, out)          VMEM
    acc = jnp.dot(e_ref[...], we_ref[...], preferred_element_type=jnp.float32)
    acc = acc + jnp.dot(si_ref[...], wsi_ref[...],
                        preferred_element_type=jnp.float32)
    acc = acc + jnp.dot(sj_ref[...], wsj_ref[...],
                        preferred_element_type=jnp.float32)
    acc = acc + b_ref[...]
    o_ref[...] = jnp.maximum(acc, 0.0).astype(o_ref.dtype)


def encoder_forward(edge_attr, s_i, s_j, weight, bias, *, tile_n=1024):
    """weight: (output_dim, input_dim) torch-style; bias: (output_dim,)."""
    n, e_dim = edge_attr.shape
    si_dim = s_i.shape[-1]
    sj_dim = s_j.shape[-1]
    output_dim = weight.shape[0]

    # Split the pre-transposed weight into the row blocks matching the
    # (edge_attr, S_i, S_j) concat order, so no concat is ever materialized.
    w_t = weight.T                                   # (input_dim, output_dim)
    w_e = w_t[:e_dim]                                # (e_dim,  output_dim)
    w_si = w_t[e_dim:e_dim + si_dim]                 # (si_dim, output_dim)
    w_sj = w_t[e_dim + si_dim:]                      # (sj_dim, output_dim)
    b2d = bias.reshape(1, output_dim)

    # Tile size: multiple of 8 sublanes, capped; last (padded) tile rows are
    # discarded on writeback, and there is no cross-row reduction, so padding
    # is harmless.
    tile = min(tile_n, ((n + 7) // 8) * 8)
    grid = (pl.cdiv(n, tile),)

    out = pl.pallas_call(
        encoder_kernel,
        out_shape=jax.ShapeDtypeStruct((n, output_dim), edge_attr.dtype),
        grid=grid,
        in_specs=[
            pl.BlockSpec((tile, e_dim), lambda i: (i, 0)),
            pl.BlockSpec((tile, si_dim), lambda i: (i, 0)),
            pl.BlockSpec((tile, sj_dim), lambda i: (i, 0)),
            pl.BlockSpec((e_dim, output_dim), lambda i: (0, 0)),
            pl.BlockSpec((si_dim, output_dim), lambda i: (0, 0)),
            pl.BlockSpec((sj_dim, output_dim), lambda i: (0, 0)),
            pl.BlockSpec((1, output_dim), lambda i: (0, 0)),
        ],
        out_specs=pl.BlockSpec((tile, output_dim), lambda i: (i, 0)),
        compiler_params=pltpu.CompilerParams(
            dimension_semantics=("parallel",)),
    )(edge_attr, s_i, s_j, w_e, w_si, w_sj, b2d)
    return out


def _reference(edge_attr, s_i, s_j, weight, bias):
    x = jnp.concatenate((edge_attr, s_i, s_j), axis=-1)
    return jnp.maximum(x @ weight.T + bias, 0.0)


if __name__ == "__main__":
    key = jax.random.PRNGKey(0)
    k_e, k_si, k_sj, k_w, k_b = jax.random.split(key, 5)

    # Small shapes consistent with the module: N edges, feature dims that
    # concat to input_dim; Linear(input_dim -> output_dim).
    n_edges = 8
    edge_dim, s_dim = 4, 14
    input_dim = edge_dim + 2 * s_dim      # 32
    output_dim = 32

    edge_attr = jax.random.normal(k_e, (n_edges, edge_dim), dtype=jnp.float32)
    s_i = jax.random.normal(k_si, (n_edges, s_dim), dtype=jnp.float32)
    s_j = jax.random.normal(k_sj, (n_edges, s_dim), dtype=jnp.float32)

    # Deterministic parameter init (torch-style uniform(-1/sqrt(in), 1/sqrt(in))).
    bound = 1.0 / (input_dim ** 0.5)
    weight = jax.random.uniform(k_w, (output_dim, input_dim),
                                minval=-bound, maxval=bound, dtype=jnp.float32)
    bias = jax.random.uniform(k_b, (output_dim,),
                              minval=-bound, maxval=bound, dtype=jnp.float32)

    # Small run (single tile).
    out = encoder_forward(edge_attr, s_i, s_j, weight, bias)
    out = jax.block_until_ready(out)
    ref = _reference(edge_attr, s_i, s_j, weight, bias)
    assert out.shape == (n_edges, output_dim)
    assert jnp.allclose(out, ref, atol=1e-5, rtol=1e-5)

    # Larger run exercising the tiled, pipelined path (non-multiple of the
    # tile size -> padded last tile).
    n_big = 1032
    kb_e, kb_si, kb_sj = jax.random.split(jax.random.PRNGKey(1), 3)
    e_big = jax.random.normal(kb_e, (n_big, edge_dim), dtype=jnp.float32)
    si_big = jax.random.normal(kb_si, (n_big, s_dim), dtype=jnp.float32)
    sj_big = jax.random.normal(kb_sj, (n_big, s_dim), dtype=jnp.float32)
    out_big = encoder_forward(e_big, si_big, sj_big, weight, bias)
    out_big = jax.block_until_ready(out_big)
    ref_big = _reference(e_big, si_big, sj_big, weight, bias)
    assert out_big.shape == (n_big, output_dim)
    assert jnp.allclose(out_big, ref_big, atol=1e-5, rtol=1e-5)

    print("KERNEL_OK")
</pallas_src>

<mosaic_0001>
module attributes {stable_mosaic.version = 11 : i64} {
  func.func @encoder_kernel(%arg0: i32, %arg1: memref<8x4xf32, #tpu.memory_space<vmem>>, %arg2: memref<8x14xf32, #tpu.memory_space<vmem>>, %arg3: memref<8x14xf32, #tpu.memory_space<vmem>>, %arg4: memref<4x32xf32, #tpu.memory_space<vmem>>, %arg5: memref<14x32xf32, #tpu.memory_space<vmem>>, %arg6: memref<14x32xf32, #tpu.memory_space<vmem>>, %arg7: memref<1x32xf32, #tpu.memory_space<vmem>>, %arg8: memref<8x32xf32, #tpu.memory_space<vmem>>) attributes {dimension_semantics = [#tpu.dimension_semantics<parallel>], iteration_bounds = array<i64: 1>, scalar_prefetch = 0 : i64, scratch_operands = 0 : i64, tpu.core_type = #tpu.core_type<tc>, window_params = [{transform_indices = @transform_0, window_bounds = array<i64: 8, 4>}, {transform_indices = @transform_1, window_bounds = array<i64: 8, 14>}, {transform_indices = @transform_2, window_bounds = array<i64: 8, 14>}, {pipeline_mode = #tpu.pipeline_mode<synchronous>, transform_indices = @transform_3, window_bounds = array<i64: 4, 32>}, {pipeline_mode = #tpu.pipeline_mode<synchronous>, transform_indices = @transform_4, window_bounds = array<i64: 14, 32>}, {pipeline_mode = #tpu.pipeline_mode<synchronous>, transform_indices = @transform_5, window_bounds = array<i64: 14, 32>}, {pipeline_mode = #tpu.pipeline_mode<synchronous>, transform_indices = @transform_6, window_bounds = array<i64: 1, 32>}, {transform_indices = @transform_7, window_bounds = array<i64: 8, 32>}]} {
    %c0 = arith.constant 0 : index
    %c0_0 = arith.constant 0 : index
    %0 = vector.load %arg1[%c0, %c0_0] : memref<8x4xf32, #tpu.memory_space<vmem>>, vector<8x4xf32>
    %c0_1 = arith.constant 0 : index
    %c0_2 = arith.constant 0 : index
    %1 = vector.load %arg4[%c0_1, %c0_2] : memref<4x32xf32, #tpu.memory_space<vmem>>, vector<4x32xf32>
    %cst = arith.constant dense<0.000000e+00> : vector<8x32xf32>
    %2 = tpu.matmul %0, %1, %cst {dimension_numbers = #tpu.dot_dimension_numbers<[1], [0], [0], [1], [0, 0, 1, 1], [], []>} : vector<8x4xf32>, vector<4x32xf32>, vector<8x32xf32> -> vector<8x32xf32>
    %c0_3 = arith.constant 0 : index
    %c0_4 = arith.constant 0 : index
    %3 = vector.load %arg2[%c0_3, %c0_4] : memref<8x14xf32, #tpu.memory_space<vmem>>, vector<8x14xf32>
    %c0_5 = arith.constant 0 : index
    %c0_6 = arith.constant 0 : index
    %4 = vector.load %arg5[%c0_5, %c0_6] : memref<14x32xf32, #tpu.memory_space<vmem>>, vector<14x32xf32>
    %cst_7 = arith.constant dense<0.000000e+00> : vector<8x32xf32>
    %5 = tpu.matmul %3, %4, %cst_7 {dimension_numbers = #tpu.dot_dimension_numbers<[1], [0], [0], [1], [0, 0, 1, 1], [], []>} : vector<8x14xf32>, vector<14x32xf32>, vector<8x32xf32> -> vector<8x32xf32>
    %6 = arith.addf %2, %5 : vector<8x32xf32>
    %c0_8 = arith.constant 0 : index
    %c0_9 = arith.constant 0 : index
    %7 = vector.load %arg3[%c0_8, %c0_9] : memref<8x14xf32, #tpu.memory_space<vmem>>, vector<8x14xf32>
    %c0_10 = arith.constant 0 : index
    %c0_11 = arith.constant 0 : index
    %8 = vector.load %arg6[%c0_10, %c0_11] : memref<14x32xf32, #tpu.memory_space<vmem>>, vector<14x32xf32>
    %cst_12 = arith.constant dense<0.000000e+00> : vector<8x32xf32>
    %9 = tpu.matmul %7, %8, %cst_12 {dimension_numbers = #tpu.dot_dimension_numbers<[1], [0], [0], [1], [0, 0, 1, 1], [], []>} : vector<8x14xf32>, vector<14x32xf32>, vector<8x32xf32> -> vector<8x32xf32>
    %10 = arith.addf %6, %9 : vector<8x32xf32>
    %c0_13 = arith.constant 0 : index
    %c0_14 = arith.constant 0 : index
    %11 = vector.load %arg7[%c0_13, %c0_14] : memref<1x32xf32, #tpu.memory_space<vmem>>, vector<1x32xf32>
    %12 = vector.broadcast %11 : vector<1x32xf32> to vector<8x32xf32>
    %13 = arith.addf %10, %12 : vector<8x32xf32>
    %cst_15 = arith.constant 0.000000e+00 : f32
    %14 = vector.broadcast %cst_15 : f32 to vector<8x32xf32>
    %15 = arith.maximumf %13, %14 : vector<8x32xf32>
    %c0_16 = arith.constant 0 : index
    %c0_17 = arith.constant 0 : index
    %16 = vector.load %arg8[%c0_16, %c0_17] : memref<8x32xf32, #tpu.memory_space<vmem>>, vector<8x32xf32>
    tpu.vector_store %arg8[%c0_16, %c0_17], %15 {strides = array<i32>} : memref<8x32xf32, #tpu.memory_space<vmem>>, vector<8x32xf32>,
    return
  }
  func.func @transform_0(%arg0: i32) -> (i32, i32) {
    %c0_i32 = arith.constant 0 : i32
    %c0_i32_0 = arith.constant 0 : i32
    return %arg0, %c0_i32 : i32, i32
  }
  func.func @transform_1(%arg0: i32) -> (i32, i32) {
    %c0_i32 = arith.constant 0 : i32
    %c0_i32_0 = arith.constant 0 : i32
    return %arg0, %c0_i32 : i32, i32
  }
  func.func @transform_2(%arg0: i32) -> (i32, i32) {
    %c0_i32 = arith.constant 0 : i32
    %c0_i32_0 = arith.constant 0 : i32
    return %arg0, %c0_i32 : i32, i32
  }
  func.func @transform_3(%arg0: i32) -> (i32, i32) {
    %c0_i32 = arith.constant 0 : i32
    %c0_i32_0 = arith.constant 0 : i32
    %c0_i32_1 = arith.constant 0 : i32
    return %c0_i32, %c0_i32_0 : i32, i32
  }
  func.func @transform_4(%arg0: i32) -> (i32, i32) {
    %c0_i32 = arith.constant 0 : i32
    %c0_i32_0 = arith.constant 0 : i32
    %c0_i32_1 = arith.constant 0 : i32
    return %c0_i32, %c0_i32_0 : i32, i32
  }
  func.func @transform_5(%arg0: i32) -> (i32, i32) {
    %c0_i32 = arith.constant 0 : i32
    %c0_i32_0 = arith.constant 0 : i32
    %c0_i32_1 = arith.constant 0 : i32
    return %c0_i32, %c0_i32_0 : i32, i32
  }
  func.func @transform_6(%arg0: i32) -> (i32, i32) {
    %c0_i32 = arith.constant 0 : i32
    %c0_i32_0 = arith.constant 0 : i32
    %c0_i32_1 = arith.constant 0 : i32
    return %c0_i32, %c0_i32_0 : i32, i32
  }
  func.func @transform_7(%arg0: i32) -> (i32, i32) {
    %c0_i32 = arith.constant 0 : i32
    %c0_i32_0 = arith.constant 0 : i32
    return %arg0, %c0_i32 : i32, i32
  }
}

</mosaic_0001>

<llo_original>
// kernel: tpu_custom_call.1
$region0: #{tpu_custom_call.1}
  #allocation0 [shape = 'u32[]', space=smem, size = 0x4, offset = 0x4, fixed_abs, tag = 'smem constant byte address 0x4 - core index']
  #allocation1 [shape = 'u32[72,128]{1,0:T(1,128)}', space=vmem, size = 0x9000, scoped, tag = 'internal scratch']
  %s0 = inlined_call_operand.vmem [shape: f32[8,4], index: 0, kind: input, shape index: {}]
  %s1 = inlined_call_operand.hbm [shape: f32[8,14], index: 1, kind: input, shape index: {}]
  %s2 = inlined_call_operand.hbm [shape: f32[8,14], index: 2, kind: input, shape index: {}]
  %s3 = inlined_call_operand.hbm [shape: f32[4,32], index: 3, kind: input, shape index: {}]
  %s4 = inlined_call_operand.hbm [shape: f32[14,32], index: 4, kind: input, shape index: {}]
  %s5 = inlined_call_operand.vmem [shape: f32[14,32], index: 5, kind: input, shape index: {}]
  %s6 = inlined_call_operand.vmem [shape: f32[1,32], index: 6, kind: input, shape index: {}]
  %s7 = inlined_call_operand.hbm [shape: f32[8,32], index: 7, kind: output, shape index: {}]
  %s8 = sld [smem:[#allocation0]]
  $region54: #{tpu_custom_call.1} parent=0
    _
  %s10 = ssub.s32 1, %s8
  %s11 = scalar_select 0, %s10, %s8
  $region1: #{tpu_custom_call.1} parent=0
    #allocation2 [shape = 'u8[4096]{0}', space=vmem, size = 0x1000, scoped, tag = 'input window, operand 1, single buffered']
    #allocation3 [shape = 's32[1]{0}', space=sflag, size = 0x4, scoped, tag = 'scoped memory for tpu_custom_call.1']
    #allocation4 [shape = 's32[1]{0}', space=sflag, size = 0x4, scoped, tag = 'scoped memory for tpu_custom_call.1']
    #allocation5 [shape = 'u8[4096]{0}', space=vmem, size = 0x1000, scoped, tag = 'input window, operand 2, single buffered']
    #allocation6 [shape = 's32[1]{0}', space=sflag, size = 0x4, scoped, tag = 'scoped memory for tpu_custom_call.1']
    #allocation7 [shape = 'u8[2048]{0}', space=vmem, size = 0x800, scoped, tag = 'input window, operand 3, single buffered']
    #allocation8 [shape = 'u8[8192]{0}', space=vmem, size = 0x2000, scoped, tag = 'input window, operand 4, single buffered']
    #allocation9 [shape = 's32[1]{0}', space=sflag, size = 0x4, scoped, tag = 'scoped memory for tpu_custom_call.1']
    #allocation10 [shape = 'u8[4096]{0}', space=vmem, size = 0x1000, scoped, tag = 'output window, operand 0, single buffered']
    %12 = vsyncpa [#allocation3], 0
    %13 = vsyncpa [#allocation6], 0
    %14 = vsyncpa [#allocation9], 0
    %15 = vsyncpa [#allocation4], 0
    // Predicated region
    $region2: #{tpu_custom_call.1} parent=1 // pred_check
      _
    $region3: #{tpu_custom_call.1} parent=1 // pred_check_branch
      %17 = sbr.rel (0) target = $region5
    $region4: #{tpu_custom_call.1} parent=1 // pred_region
      _
    $region5: #{tpu_custom_call.1} parent=1 // pred_fallthru
      _
    // Predicated region
    $region6: #{tpu_custom_call.1} parent=1 // pred_check
      _
    $region7: #{tpu_custom_call.1} parent=1 // pred_check_branch
      %19 = sbr.rel (0) target = $region9
    $region8: #{tpu_custom_call.1} parent=1 // pred_region
      %21 = vsyncadd [#allocation3], 0
      %s23 = sshll.u32 %s1, 4
      %s24 = int_to_ptr.hbm [resolvable:$true] %s23
      %s25 = sshll.u32 [#allocation2], 4
      %s26 = int_to_ptr.vmem [resolvable:$true] %s25
      %28 = dma.hbm_to_vmem [thread:$0]  %s24, 128, %s26, [#allocation3]
    $region9: #{tpu_custom_call.1} parent=1 // pred_fallthru
      _
    // Predicated region
    $region10: #{tpu_custom_call.1} parent=1 // pred_check
      _
    $region11: #{tpu_custom_call.1} parent=1 // pred_check_branch
      %30 = sbr.rel (0) target = $region13
    $region12: #{tpu_custom_call.1} parent=1 // pred_region
      %32 = vsyncadd [#allocation6], 0
      %s34 = sshll.u32 %s2, 4
      %s35 = int_to_ptr.hbm [resolvable:$true] %s34
      %s36 = sshll.u32 [#allocation5], 4
      %s37 = int_to_ptr.vmem [resolvable:$true] %s36
      %39 = dma.hbm_to_vmem [thread:$0]  %s35, 128, %s37, [#allocation6]
    $region13: #{tpu_custom_call.1} parent=1 // pred_fallthru
      _
    // Predicated region
    $region14: #{tpu_custom_call.1} parent=1 // pred_check
      _
    $region15: #{tpu_custom_call.1} parent=1 // pred_check_branch
      %41 = sbr.rel (0) target = $region17
    $region16: #{tpu_custom_call.1} parent=1 // pred_region
      %43 = vsyncadd [#allocation6], 0
      %s45 = sshll.u32 %s3, 4
      %s46 = int_to_ptr.hbm [resolvable:$true] %s45
      %s47 = sshll.u32 [#allocation7], 4
      %s48 = int_to_ptr.vmem [resolvable:$true] %s47
      %50 = dma.hbm_to_vmem [thread:$0]  %s46, 64, %s48, [#allocation6]
    $region17: #{tpu_custom_call.1} parent=1 // pred_fallthru
      _
    // Predicated region
    $region18: #{tpu_custom_call.1} parent=1 // pred_check
      _
    $region19: #{tpu_custom_call.1} parent=1 // pred_check_branch
      %52 = sbr.rel (0) target = $region21
    $region20: #{tpu_custom_call.1} parent=1 // pred_region
      %54 = vsyncadd [#allocation9], 0
      %s55 = sshll.u32 %s4, 4
      %s56 = int_to_ptr.hbm [resolvable:$true] %s55
      %s57 = sshll.u32 [#allocation8], 4
      %s58 = int_to_ptr.vmem [resolvable:$true] %s57
      %63 = dma.hbm_to_vmem [thread:$0]  %s56, 256, %s58, [#allocation9], 128, 128, 8
    $region21: #{tpu_custom_call.1} parent=1 // pred_fallthru
      _
    // Predicated region
    $region22: #{tpu_custom_call.1} parent=1 // pred_check
      _
    $region23: #{tpu_custom_call.1} parent=1 // pred_check_branch
      %65 = sbr.rel (0) target = $region25
    $region24: #{tpu_custom_call.1} parent=1 // pred_region
      _
    $region25: #{tpu_custom_call.1} parent=1 // pred_fallthru
      _
    // Predicated region
    $region26: #{tpu_custom_call.1} parent=1 // pred_check
      _
    $region27: #{tpu_custom_call.1} parent=1 // pred_check_branch
      %67 = sbr.rel (0) target = $region29
    $region28: #{tpu_custom_call.1} parent=1 // pred_region
      _
    $region29: #{tpu_custom_call.1} parent=1 // pred_fallthru
      _
    // Predicated region
    $region30: #{tpu_custom_call.1} parent=1 // pred_check
      _
    $region31: #{tpu_custom_call.1} parent=1 // pred_check_branch
      %69 = sbr.rel (0) target = $region33
    $region32: #{tpu_custom_call.1} parent=1 // pred_region
      %71 = dma.done [#allocation3], 128
    $region33: #{tpu_custom_call.1} parent=1 // pred_fallthru
      _
    // Predicated region
    $region34: #{tpu_custom_call.1} parent=1 // pred_check
      _
    $region35: #{tpu_custom_call.1} parent=1 // pred_check_branch
      %73 = sbr.rel (0) target = $region37
    $region36: #{tpu_custom_call.1} parent=1 // pred_region
      %75 = dma.done [#allocation6], 128
    $region37: #{tpu_custom_call.1} parent=1 // pred_fallthru
      _
    // Predicated region
    $region38: #{tpu_custom_call.1} parent=1 // pred_check
      _
    $region39: #{tpu_custom_call.1} parent=1 // pred_check_branch
      %77 = sbr.rel (0) target = $region41
    $region40: #{tpu_custom_call.1} parent=1 // pred_region
      %79 = dma.done [#allocation6], 64
    $region41: #{tpu_custom_call.1} parent=1 // pred_fallthru
      _
    // Predicated region
    $region42: #{tpu_custom_call.1} parent=1 // pred_check
      _
    $region43: #{tpu_custom_call.1} parent=1 // pred_check_branch
      %81 = sbr.rel (0) target = $region45
    $region44: #{tpu_custom_call.1} parent=1 // pred_region
      %83 = dma.done [#allocation9], 256
    $region45: #{tpu_custom_call.1} parent=1 // pred_fallthru
      _
    %v84 = vld [vmem:[%s0] sm:$0xff]
    %v85 = vld [vmem:[#allocation7] sm:$0xf]
    %v86 = vld [vmem:[#allocation2] sm:$0xff]
    %v87 = vld [vmem:[#allocation8] sm:$0xff]
    %v88 = vld [vmem:[#allocation8 + $0x8] sm:$0x3f]
    %vm89 = vcmask 113664
    %v91 = vsel %vm89, %v86, 0
    %vm93 = vcmask 1045504
    %v95 = vsel %vm93, %v88, 0
    %97 = vmatpush.msra.mxu0 0.0
    %98 = vmatpush.msra.mxu0 0.0
    %99 = vmatpush.msra.mxu0 0.0
    %100 = vmatpush.msra.mxu0 0.0
    %101 = vmatpush.msra.mxu0 0.0
    %102 = vmatpush.msra.mxu0 0.0
    %103 = vmatpush.msra.mxu0 0.0
    %104 = vmatpush.msra.mxu0 0.0
    %105 = vmatpush.msra.mxu0 0.0
    %106 = vmatpush.msra.mxu0 0.0
    %107 = vmatpush.msra.mxu0 0.0
    %108 = vmatpush.msra.mxu0 0.0
    %109 = vmatpush.msra.mxu0 0.0
    %110 = vmatpush.msra.mxu0 0.0
    %111 = vmatpush.msra.mxu0 %v95
    %112 = vmatpush.msra.mxu0 %v87
    %113 = vmatmul.f32.gmra.mxu0 %v91
    %v114 = vpop.f32.mrf.mxu0
    %v115 = vadd.f32 0.0, %v114
    %116 = vdwg.mxu0
    %vm117 = vcmask 31744
    %v119 = vsel %vm117, %v84, 0
    %vm121 = vcmask 1043456
    %v123 = vsel %vm121, %v85, 0
    %125 = vmatpush.msra.mxu0 0.0
    %126 = vmatpush.msra.mxu0 0.0
    %127 = vmatpush.msra.mxu0 0.0
    %128 = vmatpush.msra.mxu0 0.0
    %129 = vmatpush.msra.mxu0 0.0
    %130 = vmatpush.msra.mxu0 0.0
    %131 = vmatpush.msra.mxu0 0.0
    %132 = vmatpush.msra.mxu0 0.0
    %133 = vmatpush.msra.mxu0 0.0
    %134 = vmatpush.msra.mxu0 0.0
    %135 = vmatpush.msra.mxu0 0.0
    %136 = vmatpush.msra.mxu0 0.0
    %137 = vmatpush.msra.mxu0 0.0
    %138 = vmatpush.msra.mxu0 0.0
    %139 = vmatpush.msra.mxu0 0.0
    %140 = vmatpush.msra.mxu0 %v123
    %141 = vmatmul.f32.gmra.mxu0 %v119
    %v142 = vpop.f32.mrf.mxu0
    %v143 = vadd.f32 %v115, %v142
    %144 = vdwg.mxu0
    %v145 = vld [vmem:[#allocation5] sm:$0xff]
    %v146 = vld [vmem:[%s5] sm:$0xff]
    %v147 = vld [vmem:[%s5 + $0x8] sm:$0x3f]
    %v149 = vsel %vm89, %v145, 0
    %v152 = vsel %vm93, %v147, 0
    %154 = vmatpush.msra.mxu0 0.0
    %155 = vmatpush.msra.mxu0 0.0
    %156 = vmatpush.msra.mxu0 0.0
    %157 = vmatpush.msra.mxu0 0.0
    %158 = vmatpush.msra.mxu0 0.0
    %159 = vmatpush.msra.mxu0 0.0
    %160 = vmatpush.msra.mxu0 0.0
    %161 = vmatpush.msra.mxu0 0.0
    %162 = vmatpush.msra.mxu0 0.0
    %163 = vmatpush.msra.mxu0 0.0
    %164 = vmatpush.msra.mxu0 0.0
    %165 = vmatpush.msra.mxu0 0.0
    %166 = vmatpush.msra.mxu0 0.0
    %167 = vmatpush.msra.mxu0 0.0
    %168 = vmatpush.msra.mxu0 %v152
    %169 = vmatpush.msra.mxu0 %v146
    %170 = vmatmul.f32.gmra.mxu0 %v149
    %v171 = vpop.f32.mrf.mxu0
    %v172 = vadd.f32 0.0, %v171
    %173 = vdwg.mxu0
    %v174 = vadd.f32 %v143, %v172
    %v175 = vld [vmem:[%s6] sm:$0x1]
    %v177 = vperm.slane %v175, 0
    %v179 = vadd.f32 %v174, %v177
    %v180 = vmax.f32 %v179, 0.0
    %vm181 = vcmask 261120
    %182 = vst.msk [vmem:[#allocation10] sm:$0xff] %vm181, %v180
    // Predicated region
    $region46: #{tpu_custom_call.1} parent=1 // pred_check
      _
    $region47: #{tpu_custom_call.1} parent=1 // pred_check_branch
      %184 = sbr.rel (0) target = $region49
    $region48: #{tpu_custom_call.1} parent=1 // pred_region
      %186 = vsyncadd [#allocation4], 0
      %s188 = sshll.u32 [#allocation10], 4
      %s189 = int_to_ptr.vmem [resolvable:$true] %s188
      %s190 = sshll.u32 %s7, 4
      %s191 = int_to_ptr.hbm [resolvable:$true] %s190
      %193 = dma.vmem_to_hbm [thread:$0]  %s189, 128, %s191, [#allocation4]
    $region49: #{tpu_custom_call.1} parent=1 // pred_fallthru
      _
    // Predicated region
    $region50: #{tpu_custom_call.1} parent=1 // pred_check
      _
    $region51: #{tpu_custom_call.1} parent=1 // pred_check_branch
      %195 = sbr.rel (0) target = $region53
    $region52: #{tpu_custom_call.1} parent=1 // pred_region
      %197 = dma.done [#allocation4], 128
    $region53: #{tpu_custom_call.1} parent=1 // pred_fallthru
      _
    %198 = vsyncpa [#allocation3], 1
    %199 = vsyncpa [#allocation6], 1
    %200 = vsyncpa [#allocation9], 1
    %201 = vsyncpa [#allocation4], 1

</llo_original>
